<compile_context>
chip_gen: v7x
topology: tpu7x:2x2x1
jax: 0.10.0
libtpu: 0.0.40
codegen_flags: <defaults>
</compile_context>

<pallas_src>
import jax
import jax.numpy as jnp
from jax import lax
from jax.experimental import pallas as pl
from jax.experimental.pallas import tpu as pltpu


def _normalized_scores():
    # static per-class weights, identical to the PyTorch module
    scoresham = 10000.0 / 1274.0
    scorestere = 10000.0 / 2810.0
    scoreobj = 10000.0 / 2202.0
    scorevio = 10000.0 / 953.0
    summer = scoresham + scorestere + scoreobj + scorevio
    return (scoresham / summer, scorestere / summer,
            scoreobj / summer, scorevio / summer)


def _round_up(x, m):
    return (x + m - 1) // m * m


def multilabels_loss(logits, targets, weight, *, batch_tile=None):
    """logits: (B, C) probabilities in (0,1), C >= 4; targets: (B, 5).

    `weight` is the module's __init__ hyperparameter and must be a static
    Python number (route it through an SMEM scalar if it ever needs to be a
    traced value).
    """
    B, C = logits.shape
    assert C >= 4, "need at least 4 class probabilities"
    assert targets.shape == (B, 5)

    s_sham, s_stere, s_obj, s_vio = _normalized_scores()
    weight_f = float(weight)
    inv_b = 1.0 / float(B)

    # Lane-dense layout: batch -> 128-wide lane axis. Native dtype is kept;
    # the kernel upcasts per tile.
    logits_t = jnp.transpose(logits)    # (C, B)
    targets_t = jnp.transpose(targets)  # (5, B)

    # --- tile sizing against a scoped-VMEM budget -------------------------
    # double-buffered input blocks + the (1, tb) f32 lane-accumulator.
    bytes_per_lane = 2 * (C * logits_t.dtype.itemsize
                          + 5 * targets_t.dtype.itemsize) + 4
    vmem_limit_bytes = 48 * 1024 * 1024   # safe on v5e/v6e (128 MiB) and v7x (64 MiB)
    tile_budget = 24 * 1024 * 1024
    if batch_tile is None:
        cap = max(128, (tile_budget // bytes_per_lane) // 128 * 128)
        batch_tile = min(_round_up(B, 128), cap)
    tb = int(batch_tile)
    assert tb % 128 == 0

    n_tiles = (B + tb - 1) // tb          # real tiles covering the batch
    cores = 2                             # leading "parallel" axis (v7x: one half per TC)
    n_half = (n_tiles + cores - 1) // cores

    def in_map(c, i):
        # Clamp the dummy tile (when n_tiles is odd / < cores) onto the last
        # real tile: its contribution is zeroed by the in-kernel lane mask and
        # its DMA is skipped because the block index repeats.
        return (0, jnp.minimum(c * n_half + i, n_tiles - 1))

    def kernel(logits_ref, targets_ref, out_ref, acc_ref):
        c = pl.program_id(0)
        i = pl.program_id(1)

        @pl.when(i == 0)
        def _init():
            acc_ref[...] = jnp.zeros_like(acc_ref)

        lg = logits_ref[...].astype(jnp.float32)    # (C, tb), batch on lanes
        tg = targets_ref[...].astype(jnp.float32)   # (5, tb)

        # ---- MSE per-lane term: (max over classes - targets[:, 0])^2
        maxkateg = jnp.max(lg, axis=0, keepdims=True)       # (1, tb)
        diff = maxkateg - tg[0:1, :]
        total = weight_f * (diff * diff)                    # (1, tb)

        # ---- fused 4-class BCE (clamp logs at -100 like torch.nn.BCELoss;
        # clamp BEFORE multiplying by the label so 0-labels stay finite).
        preds = lg[0:4, :]                                  # (4, tb)
        labs = tg[1:5, :]                                   # (4, tb)
        log_p = jnp.maximum(jnp.log(preds), -100.0)
        log_1mp = jnp.maximum(jnp.log(1.0 - preds), -100.0)
        per = -(labs * log_p + (1.0 - labs) * log_1mp)      # (4, tb)
        total = total + (s_sham * per[0:1, :] + s_stere * per[1:2, :]
                         + s_obj * per[2:3, :] + s_vio * per[3:4, :])

        # ---- mask lanes beyond the true batch (ragged last block, clamped
        # dummy tiles); the select also squashes any NaN/Inf garbage from the
        # partially valid block read.
        start = (c * n_half + i) * tb
        lane = lax.broadcasted_iota(jnp.int32, (1, tb), 1)
        valid = (lane + start) < B
        acc_ref[...] += jnp.where(valid, total, 0.0)

        # ---- finalize: one cross-lane reduce + one store per core.
        @pl.when(i == n_half - 1)
        def _finalize():
            part = jnp.sum(acc_ref[...])
            out_ref[...] = jnp.broadcast_to(part, (1, 8, 128)).astype(jnp.float32)

    out = pl.pallas_call(
        kernel,
        out_shape=jax.ShapeDtypeStruct((cores, 8, 128), jnp.float32),
        grid=(cores, n_half),
        in_specs=[
            pl.BlockSpec((C, tb), in_map),
            pl.BlockSpec((5, tb), in_map),
        ],
        out_specs=pl.BlockSpec((1, 8, 128), lambda c, i: (c, 0, 0)),
        scratch_shapes=[pltpu.VMEM((1, tb), jnp.float32)],
        compiler_params=pltpu.CompilerParams(
            dimension_semantics=("parallel", "arbitrary"),
            vmem_limit_bytes=vmem_limit_bytes),
    )(logits_t, targets_t)

    # sum the two per-core partials, then apply the 1/B of the mean reductions
    return (out[0, 0, 0] + out[1, 0, 0]) * inv_b


def _reference(logits, targets, weight):
    # pure-JAX reference mirroring the PyTorch forward
    logits = logits.astype(jnp.float32)
    targets = targets.astype(jnp.float32)
    maxkateg = jnp.max(logits, axis=-1)
    mseloss = jnp.mean((maxkateg - targets[:, 0]) ** 2)

    def bce(p, t):
        return jnp.mean(-(t * jnp.maximum(jnp.log(p), -100.0)
                          + (1.0 - t) * jnp.maximum(jnp.log(1.0 - p), -100.0)))

    s_sham, s_stere, s_obj, s_vio = _normalized_scores()
    ml = (s_sham * bce(logits[:, 0], targets[:, 1])
          + s_stere * bce(logits[:, 1], targets[:, 2])
          + s_obj * bce(logits[:, 2], targets[:, 3])
          + s_vio * bce(logits[:, 3], targets[:, 4]))
    return ml + weight * mseloss


def _make_inputs(key, B, C, dtype=jnp.float32):
    k1, k2, k3 = jax.random.split(key, 3)
    # logits must be probabilities in (0,1) for BCELoss
    logits = jax.nn.sigmoid(jax.random.normal(k1, (B, C), dtype=jnp.float32))
    # targets: col 0 = regression target; cols 1..4 = binary labels
    first = jax.random.uniform(k2, (B, 1), dtype=jnp.float32)
    labels = jax.random.bernoulli(k3, 0.5, (B, 4)).astype(jnp.float32)
    return logits.astype(dtype), jnp.concatenate([first, labels], axis=1)


if __name__ == "__main__":
    WEIGHT = 0.5  # the module's __init__ `weight` hyperparameter
    key = jax.random.PRNGKey(0)
    ka, kb, kc = jax.random.split(key, 3)

    # small single-tile case (block wider than the batch -> in-kernel mask)
    logits, targets = _make_inputs(ka, B=8, C=4)
    loss = multilabels_loss(logits, targets, WEIGHT)
    jax.block_until_ready(loss)
    ref = _reference(logits, targets, WEIGHT)
    assert jnp.allclose(loss, ref, rtol=1e-5, atol=1e-5), (loss, ref)

    # multi-tile ragged case (odd tile count -> clamped dummy tile on core 1)
    logits2, targets2 = _make_inputs(kb, B=300, C=4)
    loss2 = multilabels_loss(logits2, targets2, WEIGHT, batch_tile=128)
    jax.block_until_ready(loss2)
    ref2 = _reference(logits2, targets2, WEIGHT)
    assert jnp.allclose(loss2, ref2, rtol=1e-5, atol=1e-5), (loss2, ref2)

    # bf16-logits case (exercises native-dtype DMA + in-kernel upcast and an
    # even split of tiles across the two per-core partial sums)
    logits3, targets3 = _make_inputs(kc, B=256, C=4, dtype=jnp.bfloat16)
    loss3 = multilabels_loss(logits3, targets3, WEIGHT, batch_tile=128)
    jax.block_until_ready(loss3)
    ref3 = _reference(logits3, targets3, WEIGHT)
    assert jnp.allclose(loss3, ref3, rtol=1e-4, atol=1e-4), (loss3, ref3)

    print("KERNEL_OK")
</pallas_src>

<mosaic_0001>
module attributes {stable_mosaic.version = 11 : i64} {
  func.func @kernel(%arg0: i32, %arg1: i32, %arg2: memref<4x128xf32, #tpu.memory_space<vmem>>, %arg3: memref<5x128xf32, #tpu.memory_space<vmem>>, %arg4: memref<1x8x128xf32, #tpu.memory_space<vmem>>, %arg5: memref<1x128xf32, #tpu.memory_space<vmem>>) attributes {dimension_semantics = [#tpu.dimension_semantics<parallel>, #tpu.dimension_semantics<arbitrary>], iteration_bounds = array<i64: 2, 1>, scalar_prefetch = 0 : i64, scratch_operands = 1 : i64, tpu.core_type = #tpu.core_type<tc>, window_params = [{transform_indices = @transform_0, window_bounds = array<i64: 4, 128>}, {transform_indices = @transform_1, window_bounds = array<i64: 5, 128>}, {transform_indices = @transform_2, window_bounds = array<i64: 1, 8, 128>}]} {
    %c0_i32 = arith.constant 0 : i32
    %0 = arith.cmpi eq, %arg1, %c0_i32 : i32
    %1 = arith.extui %0 : i1 to i32
    %c0_i32_0 = arith.constant 0 : i32
    %2 = arith.cmpi ne, %1, %c0_i32_0 : i32
    scf.if %2 {
      %cst_21 = arith.constant 0.000000e+00 : f32
      %60 = vector.broadcast %cst_21 : f32 to vector<1x128xf32>
      %c0_22 = arith.constant 0 : index
      %c0_23 = arith.constant 0 : index
      %61 = vector.load %arg5[%c0_22, %c0_23] : memref<1x128xf32, #tpu.memory_space<vmem>>, vector<1x128xf32>
      tpu.vector_store %arg5[%c0_22, %c0_23], %60 {strides = array<i32>} : memref<1x128xf32, #tpu.memory_space<vmem>>, vector<1x128xf32>,
    } else {
    }
    %c0 = arith.constant 0 : index
    %c0_1 = arith.constant 0 : index
    %3 = vector.load %arg2[%c0, %c0_1] : memref<4x128xf32, #tpu.memory_space<vmem>>, vector<4x128xf32>
    %c0_2 = arith.constant 0 : index
    %c0_3 = arith.constant 0 : index
    %4 = vector.load %arg3[%c0_2, %c0_3] : memref<5x128xf32, #tpu.memory_space<vmem>>, vector<5x128xf32>
    %cst = arith.constant dense<0xFF800000> : vector<128xf32>
    %5 = vector.multi_reduction <maximumf>, %3, %cst [0] : vector<4x128xf32> to vector<128xf32>
    %6 = vector.shape_cast %5 : vector<128xf32> to vector<1x128xf32>
    %7 = vector.extract_strided_slice %4 {offsets = [0, 0], sizes = [1, 128], strides = [1, 1]} : vector<5x128xf32> to vector<1x128xf32>
    %8 = arith.subf %6, %7 : vector<1x128xf32>
    %9 = arith.mulf %8, %8 : vector<1x128xf32>
    %cst_4 = arith.constant 5.000000e-01 : f32
    %10 = vector.broadcast %cst_4 : f32 to vector<1x128xf32>
    %11 = arith.mulf %10, %9 : vector<1x128xf32>
    %12 = vector.extract_strided_slice %4 {offsets = [1, 0], sizes = [4, 128], strides = [1, 1]} : vector<5x128xf32> to vector<4x128xf32>
    %13 = math.log %3 : vector<4x128xf32>
    %cst_5 = arith.constant -1.000000e+02 : f32
    %14 = vector.broadcast %cst_5 : f32 to vector<4x128xf32>
    %15 = arith.maximumf %13, %14 : vector<4x128xf32>
    %cst_6 = arith.constant 1.000000e+00 : f32
    %16 = vector.broadcast %cst_6 : f32 to vector<4x128xf32>
    %17 = arith.subf %16, %3 : vector<4x128xf32>
    %18 = math.log %17 : vector<4x128xf32>
    %cst_7 = arith.constant -1.000000e+02 : f32
    %19 = vector.broadcast %cst_7 : f32 to vector<4x128xf32>
    %20 = arith.maximumf %18, %19 : vector<4x128xf32>
    %21 = arith.mulf %12, %15 : vector<4x128xf32>
    %cst_8 = arith.constant 1.000000e+00 : f32
    %22 = vector.broadcast %cst_8 : f32 to vector<4x128xf32>
    %23 = arith.subf %22, %12 : vector<4x128xf32>
    %24 = arith.mulf %23, %20 : vector<4x128xf32>
    %25 = arith.addf %21, %24 : vector<4x128xf32>
    %cst_9 = arith.constant 0.000000e+00 : f32
    %26 = vector.broadcast %cst_9 : f32 to vector<4x128xf32>
    %27 = arith.subf %26, %25 : vector<4x128xf32>
    %28 = vector.extract_strided_slice %27 {offsets = [0, 0], sizes = [1, 128], strides = [1, 1]} : vector<4x128xf32> to vector<1x128xf32>
    %cst_10 = arith.constant 0.296843648 : f32
    %29 = vector.broadcast %cst_10 : f32 to vector<1x128xf32>
    %30 = arith.mulf %29, %28 : vector<1x128xf32>
    %31 = vector.extract_strided_slice %27 {offsets = [1, 0], sizes = [1, 128], strides = [1, 1]} : vector<4x128xf32> to vector<1x128xf32>
    %cst_11 = arith.constant 0.134583205 : f32
    %32 = vector.broadcast %cst_11 : f32 to vector<1x128xf32>
    %33 = arith.mulf %32, %31 : vector<1x128xf32>
    %34 = arith.addf %30, %33 : vector<1x128xf32>
    %35 = vector.extract_strided_slice %27 {offsets = [2, 0], sizes = [1, 128], strides = [1, 1]} : vector<4x128xf32> to vector<1x128xf32>
    %cst_12 = arith.constant 0.171743333 : f32
    %36 = vector.broadcast %cst_12 : f32 to vector<1x128xf32>
    %37 = arith.mulf %36, %35 : vector<1x128xf32>
    %38 = arith.addf %34, %37 : vector<1x128xf32>
    %39 = vector.extract_strided_slice %27 {offsets = [3, 0], sizes = [1, 128], strides = [1, 1]} : vector<4x128xf32> to vector<1x128xf32>
    %cst_13 = arith.constant 0.396829814 : f32
    %40 = vector.broadcast %cst_13 : f32 to vector<1x128xf32>
    %41 = arith.mulf %40, %39 : vector<1x128xf32>
    %42 = arith.addf %38, %41 : vector<1x128xf32>
    %43 = arith.addf %11, %42 : vector<1x128xf32>
    %c1_i32 = arith.constant 1 : i32
    %44 = arith.muli %arg0, %c1_i32 : i32
    %45 = arith.addi %44, %arg1 : i32
    %c128_i32 = arith.constant 128 : i32
    %46 = arith.muli %45, %c128_i32 : i32
    %47 = tpu.iota {dimensions = array<i32: 1>} : vector<1x128xi32>
    %48 = vector.broadcast %46 : i32 to vector<1x128xi32>
    %49 = arith.addi %47, %48 : vector<1x128xi32>
    %c8_i32 = arith.constant 8 : i32
    %50 = vector.broadcast %c8_i32 : i32 to vector<1x128xi32>
    %51 = arith.cmpi slt, %49, %50 : vector<1x128xi32>
    %c0_14 = arith.constant 0 : index
    %c0_15 = arith.constant 0 : index
    %52 = vector.load %arg5[%c0_14, %c0_15] : memref<1x128xf32, #tpu.memory_space<vmem>>, vector<1x128xf32>
    %cst_16 = arith.constant 0.000000e+00 : f32
    %53 = vector.broadcast %cst_16 : f32 to vector<1x128xf32>
    %54 = arith.select %51, %43, %53 : vector<1x128xi1>, vector<1x128xf32>
    %55 = arith.addf %52, %54 : vector<1x128xf32>
    %c0_17 = arith.constant 0 : index
    %c0_18 = arith.constant 0 : index
    %56 = vector.load %arg5[%c0_17, %c0_18] : memref<1x128xf32, #tpu.memory_space<vmem>>, vector<1x128xf32>
    tpu.vector_store %arg5[%c0_17, %c0_18], %55 {strides = array<i32>} : memref<1x128xf32, #tpu.memory_space<vmem>>, vector<1x128xf32>,
    %c0_i32_19 = arith.constant 0 : i32
    %57 = arith.cmpi eq, %arg1, %c0_i32_19 : i32
    %58 = arith.extui %57 : i1 to i32
    %c0_i32_20 = arith.constant 0 : i32
    %59 = arith.cmpi ne, %58, %c0_i32_20 : i32
    scf.if %59 {
      %c0_21 = arith.constant 0 : index
      %c0_22 = arith.constant 0 : index
      %60 = vector.load %arg5[%c0_21, %c0_22] : memref<1x128xf32, #tpu.memory_space<vmem>>, vector<1x128xf32>
      %61 = vector.shape_cast %60 : vector<1x128xf32> to vector<1x1x128xf32>
      %cst_23 = arith.constant dense<0.000000e+00> : vector<1xf32>
      %62 = vector.multi_reduction <add>, %61, %cst_23 [1, 2] : vector<1x1x128xf32> to vector<1xf32>
      %63 = vector.shape_cast %62 : vector<1xf32> to vector<1x1x1xf32>
      %64 = vector.extract %63[0, 0, 0] : f32 from vector<1x1x1xf32>
      %65 = vector.broadcast %64 : f32 to vector<1x8x128xf32>
      %c0_24 = arith.constant 0 : index
      %c0_25 = arith.constant 0 : index
      %c0_26 = arith.constant 0 : index
      %66 = vector.load %arg4[%c0_24, %c0_25, %c0_26] : memref<1x8x128xf32, #tpu.memory_space<vmem>>, vector<1x8x128xf32>
      tpu.vector_store %arg4[%c0_24, %c0_25, %c0_26], %65 {strides = array<i32>} : memref<1x8x128xf32, #tpu.memory_space<vmem>>, vector<1x8x128xf32>,
    } else {
    }
    return
  }
  func.func @transform_0(%arg0: i32, %arg1: i32) -> (i32, i32) {
    %c1_i32 = arith.constant 1 : i32
    %0 = arith.muli %arg0, %c1_i32 : i32
    %1 = arith.addi %0, %arg1 : i32
    %c0_i32 = arith.constant 0 : i32
    %2 = arith.minsi %1, %c0_i32 : i32
    %c0_i32_0 = arith.constant 0 : i32
    %c0_i32_1 = arith.constant 0 : i32
    return %c0_i32_0, %2 : i32, i32
  }
  func.func @transform_1(%arg0: i32, %arg1: i32) -> (i32, i32) {
    %c1_i32 = arith.constant 1 : i32
    %0 = arith.muli %arg0, %c1_i32 : i32
    %1 = arith.addi %0, %arg1 : i32
    %c0_i32 = arith.constant 0 : i32
    %2 = arith.minsi %1, %c0_i32 : i32
    %c0_i32_0 = arith.constant 0 : i32
    %c0_i32_1 = arith.constant 0 : i32
    return %c0_i32_0, %2 : i32, i32
  }
  func.func @transform_2(%arg0: i32, %arg1: i32) -> (i32, i32, i32) {
    %c0_i32 = arith.constant 0 : i32
    %c0_i32_0 = arith.constant 0 : i32
    %c0_i32_1 = arith.constant 0 : i32
    return %arg0, %c0_i32, %c0_i32_0 : i32, i32, i32
  }
}

</mosaic_0001>

<llo_original>
// kernel: tpu_custom_call.1
$region0: #{tpu_custom_call.1}
  #allocation0 [shape = 'u32[]', space=smem, size = 0x4, offset = 0x4, fixed_abs, tag = 'smem constant byte address 0x4 - core index']
  #allocation1 [shape = 'u32[144,128]{1,0:T(1,128)}', space=vmem, size = 0x12000, scoped, tag = 'internal scratch']
  #allocation2 [shape = 'f32[1,128]{1,0:T(1,128)}', space=vmem, size = 0x200, scoped, tag = 'scratch operand']
  %s0 = inlined_call_operand.hbm [shape: f32[4,8], index: 0, kind: input, shape index: {}]
  %s1 = inlined_call_operand.hbm [shape: f32[5,8], index: 1, kind: input, shape index: {}]
  %s2 = inlined_call_operand.hbm [shape: f32[2,8,128], index: 2, kind: output, shape index: {}]
  %s3 = sld [smem:[#allocation0]]
  $region57: #{tpu_custom_call.1} parent=0
    _
  %s5 = ssub.s32 1, %s3
  %s6 = scalar_select 0, %s5, %s3
  $region1: #{tpu_custom_call.1} parent=0
    #allocation3 [shape = 'u8[4096]{0}', space=vmem, size = 0x1000, scoped, tag = 'input window, operand 0']
    #allocation4 [shape = 's32[2]{0}', space=sflag, size = 0x8, scoped, tag = 'scoped memory for tpu_custom_call.1']
    #allocation5 [shape = 's32[2]{0}', space=sflag, size = 0x8, scoped, tag = 'scoped memory for tpu_custom_call.1']
    #allocation6 [shape = 'u8[8192]{0}', space=vmem, size = 0x2000, scoped, tag = 'input window, operand 1']
    #allocation7 [shape = 's32[2]{0}', space=sflag, size = 0x8, scoped, tag = 'scoped memory for tpu_custom_call.1']
    #allocation8 [shape = 'u8[8192]{0}', space=vmem, size = 0x2000, scoped, tag = 'output window, operand 0']
    %7 = vsyncpa [#allocation4], 0
    %s8 = scalar_lea.sflag [#allocation4], 1
    %9 = vsyncpa %s8, 0
    %10 = vsyncpa [#allocation7], 0
    %s11 = scalar_lea.sflag [#allocation7], 1
    %12 = vsyncpa %s11, 0
    %13 = vsyncpa [#allocation5], 0
    %s14 = scalar_lea.sflag [#allocation5], 1
    %15 = vsyncpa %s14, 0
    loop: start=0, step=1, limit=4
    $region2: #{tpu_custom_call.1} parent=1 // loop_pre_header
      _
    $region3: #{tpu_custom_call.1} parent=1 // loop_header
      %s17 = sphi 0, %s21
      %p18 = scmp.ge.s32.totalorder %s17, 4
      %s24 = sphi 0, %s36
      %s25 = sphi 0, %s32
      %s26 = sphi 0, %s24
      %s27 = sphi 0, %s25
      %s28 = sphi 0, %s26
      %s29 = sphi 0, %s27
      %s45 = sphi 0, %s47
      %s48 = sphi 0, %s45
      %s49 = sphi 0, %s48
      %s65 = sphi 0, %s49
      %s77 = sphi 0, %s79
      %s80 = sphi 0, %s77
      %s81 = sphi 0, %s80
      %s97 = sphi 0, %s81
      %s103 = sphi 0, %s105
      %s106 = sphi 0, %s103
      %s107 = sphi 0, %s106
      %s123 = sphi 0, %s107
    $region4: #{tpu_custom_call.1} parent=1 // loop_header_branch
      %20 = sbr.rel (%p18) target = $region8
    $region5: #{tpu_custom_call.1} parent=1 // loop_body
      %s22 = ssub.s32 %s17, 1
      %s23 = ssub.s32 %s17, 2
      %s30 = sadd.s32 1, %s25
      %p31 = scmp.ge.s32.totalorder %s30, 1
      %s32 = scalar_select %p31, 0, %s30
      %s33 = sadd.s32 1, %s24
      %s34 = scalar_select %p31, %s33, %s24
      %p35 = scmp.ge.s32.totalorder %s34, 2
      %s36 = scalar_select %p35, 0, %s34
      %s37 = sadd.s32 %s24, %s25
      %p38 = scmp.lt.s32.totalorder %s37, 0
      %s39 = scalar_select %p38, %s37, 0
      %s40 = sadd.s32 %s36, %s32
      %p41 = scmp.lt.s32.totalorder %s40, 0
      %s42 = scalar_select %p41, %s40, 0
      %s43 = ssub.s32 %s39, %s42
      %p44 = scmp.eq.s32.totalorder %s43, 0
      %s46 = sadd.s32 %s45, 1
      %s47 = scalar_select %p44, %s45, %s46
      %p50 = pneg %p44
      %p51 = scmp.eq.s32.totalorder %s17, 1
      %p52 = por %p50, %p51
      %p53 = scmp.ne.s32.totalorder %s45, %s48
      %p54 = scmp.eq.s32.totalorder %s17, 0
      %p55 = por %p53, %p54
      %p56 = scmp.ne.s32.totalorder %s45, %s48
      %p57 = scmp.eq.s32.totalorder %s22, 1
      %p58 = por %p56, %p57
      %p59 = scmp.ne.s32.totalorder %s48, %s49
      %p60 = scmp.eq.s32.totalorder %s22, 0
      %p61 = por %p59, %p60
      %p62 = scmp.ne.s32.totalorder %s48, %s49
      %p63 = scmp.eq.s32.totalorder %s23, 1
      %p64 = por %p62, %p63
      %p66 = scmp.ne.s32.totalorder %s49, %s65
      %p67 = scmp.eq.s32.totalorder %s23, 0
      %p68 = por %p66, %p67
      %s69 = sadd.s32 %s24, %s25
      %p70 = scmp.lt.s32.totalorder %s69, 0
      %s71 = scalar_select %p70, %s69, 0
      %s72 = sadd.s32 %s36, %s32
      %p73 = scmp.lt.s32.totalorder %s72, 0
      %s74 = scalar_select %p73, %s72, 0
      %s75 = ssub.s32 %s71, %s74
      %p76 = scmp.eq.s32.totalorder %s75, 0
      %s78 = sadd.s32 %s77, 1
      %s79 = scalar_select %p76, %s77, %s78
      %p82 = pneg %p76
      %p83 = scmp.eq.s32.totalorder %s17, 1
      %p84 = por %p82, %p83
      %p85 = scmp.ne.s32.totalorder %s77, %s80
      %p86 = scmp.eq.s32.totalorder %s17, 0
      %p87 = por %p85, %p86
      %p88 = scmp.ne.s32.totalorder %s77, %s80
      %p89 = scmp.eq.s32.totalorder %s22, 1
      %p90 = por %p88, %p89
      %p91 = scmp.ne.s32.totalorder %s80, %s81
      %p92 = scmp.eq.s32.totalorder %s22, 0
      %p93 = por %p91, %p92
      %p94 = scmp.ne.s32.totalorder %s80, %s81
      %p95 = scmp.eq.s32.totalorder %s23, 1
      %p96 = por %p94, %p95
      %p98 = scmp.ne.s32.totalorder %s81, %s97
      %p99 = scmp.eq.s32.totalorder %s23, 0
      %p100 = por %p98, %p99
      %s101 = ssub.s32 %s24, %s36
      %p102 = scmp.eq.s32.totalorder %s101, 0
      %s104 = sadd.s32 %s103, 1
      %s105 = scalar_select %p102, %s103, %s104
      %p108 = pneg %p102
      %p109 = scmp.eq.s32.totalorder %s17, 1
      %p110 = por %p108, %p109
      %p111 = scmp.ne.s32.totalorder %s103, %s106
      %p112 = scmp.eq.s32.totalorder %s17, 0
      %p113 = por %p111, %p112
      %p114 = scmp.ne.s32.totalorder %s103, %s106
      %p115 = scmp.eq.s32.totalorder %s22, 1
      %p116 = por %p114, %p115
      %p117 = scmp.ne.s32.totalorder %s106, %s107
      %p118 = scmp.eq.s32.totalorder %s22, 0
      %p119 = por %p117, %p118
      %p120 = scmp.ne.s32.totalorder %s106, %s107
      %p121 = scmp.eq.s32.totalorder %s23, 1
      %p122 = por %p120, %p121
      %p124 = scmp.ne.s32.totalorder %s107, %s123
      %p125 = scmp.eq.s32.totalorder %s23, 0
      %p126 = por %p124, %p125
      %p127 = scmp.le.s32.totalorder 1, %s17
      %p128 = scmp.lt.s32.totalorder %s17, 3
      %p129 = pnand %p127, %p128
      %p130 = pneg %p129
      // Predicated region
      $region9: #{tpu_custom_call.1} parent=5 // pred_check
        _
      $region10: #{tpu_custom_call.1} parent=5 // pred_check_branch
        %132 = sbr.rel (%p129) target = $region12
      $region11: #{tpu_custom_call.1} parent=5 // pred_region
        %s133 = ssub.s32 %s17, 1
      $region12: #{tpu_custom_call.1} parent=5 // pred_fallthru
        _
      %p134 = scmp.lt.s32.totalorder %s17, 2
      // Predicated region
      $region13: #{tpu_custom_call.1} parent=5 // pred_check
        %p135 = pneg %p134
      $region14: #{tpu_custom_call.1} parent=5 // pred_check_branch
        %137 = sbr.rel (%p135) target = $region16
      $region15: #{tpu_custom_call.1} parent=5 // pred_region
        // Predicated region
        $region17: #{tpu_custom_call.1} parent=15 // pred_check
          %p138 = pneg %p55
        $region18: #{tpu_custom_call.1} parent=15 // pred_check_branch
          %140 = sbr.rel (%p138) target = $region20
        $region19: #{tpu_custom_call.1} parent=15 // pred_region
          %s141 = sand.u32 %s45, 1
          %s142 = scalar_lea.sflag [#allocation4], %s141
          %s143 = sand.u32 %s45, 1
          %s144 = smul.addr %s143, 4
          %s145 = scalar_lea.vmem [#allocation3], %s144
          %s146 = sadd.s32 %s24, %s25
          %p147 = scmp.lt.s32.totalorder %s146, 0
          %s148 = scalar_select %p147, %s146, 0
          %s150 = ssub.s32 64, 64
          %151 = vsyncadd %s142, %s150
          %s152 = smul.addr %s148, 64
          %s153 = scalar_lea.hbm %s0, %s152
          %s155 = sshll.u32 %s145, 4
          %s156 = int_to_ptr.vmem [resolvable:$true] %s155
          %158 = dma.hbm_to_vmem [thread:$0]  %s153, 64, %s156, %s142
        $region20: #{tpu_custom_call.1} parent=15 // pred_fallthru
          _
        // Predicated region
        $region21: #{tpu_custom_call.1} parent=15 // pred_check
          %p159 = pneg %p87
        $region22: #{tpu_custom_call.1} parent=15 // pred_check_branch
          %161 = sbr.rel (%p159) target = $region24
        $region23: #{tpu_custom_call.1} parent=15 // pred_region
          %s162 = sand.u32 %s77, 1
          %s163 = scalar_lea.sflag [#allocation7], %s162
          %s164 = sand.u32 %s77, 1
          %s165 = smul.addr %s164, 8
          %s166 = scalar_lea.vmem [#allocation6], %s165
          %s167 = sadd.s32 %s24, %s25
          %p168 = scmp.lt.s32.totalorder %s167, 0
          %s169 = scalar_select %p168, %s167, 0
          %s171 = ssub.s32 128, 128
          %172 = vsyncadd %s163, %s171
          %s173 = smul.addr %s169, 128
          %s174 = scalar_lea.hbm %s1, %s173
          %s176 = sshll.u32 %s166, 4
          %s177 = int_to_ptr.vmem [resolvable:$true] %s176
          %179 = dma.hbm_to_vmem [thread:$0]  %s174, 128, %s177, %s163
        $region24: #{tpu_custom_call.1} parent=15 // pred_fallthru
          _
      $region16: #{tpu_custom_call.1} parent=5 // pred_fallthru
        _
      %p180 = scmp.le.s32.totalorder 1, %s17
      %p181 = scmp.lt.s32.totalorder %s17, 3
      %p182 = pnand %p180, %p181
      %p183 = pneg %p182
      // Predicated region
      $region25: #{tpu_custom_call.1} parent=5 // pred_check
        _
      $region26: #{tpu_custom_call.1} parent=5 // pred_check_branch
        %185 = sbr.rel (%p182) target = $region28
      $region27: #{tpu_custom_call.1} parent=5 // pred_region
        %s186 = ssub.s32 %s17, 1
        %s187 = sand.u32 %s48, 1
        %s188 = scalar_lea.sflag [#allocation4], %s187
        %s189 = sand.u32 %s48, 1
        %s190 = smul.addr %s189, 4
        %s191 = scalar_lea.vmem [#allocation3], %s190
        // Predicated region
        $region29: #{tpu_custom_call.1} parent=27 // pred_check
          %p192 = pneg %p61
        $region30: #{tpu_custom_call.1} parent=27 // pred_check_branch
          %194 = sbr.rel (%p192) target = $region32
        $region31: #{tpu_custom_call.1} parent=27 // pred_region
          %195 = dma.done %s188, 64
        $region32: #{tpu_custom_call.1} parent=27 // pred_fallthru
          _
        %s196 = sand.u32 %s80, 1
        %s197 = scalar_lea.sflag [#allocation7], %s196
        %s198 = sand.u32 %s80, 1
        %s199 = smul.addr %s198, 8
        %s200 = scalar_lea.vmem [#allocation6], %s199
        // Predicated region
        $region33: #{tpu_custom_call.1} parent=27 // pred_check
          %p201 = pneg %p93
        $region34: #{tpu_custom_call.1} parent=27 // pred_check_branch
          %203 = sbr.rel (%p201) target = $region36
        $region35: #{tpu_custom_call.1} parent=27 // pred_region
          %204 = dma.done %s197, 128
        $region36: #{tpu_custom_call.1} parent=27 // pred_fallthru
          _
        %s205 = sand.u32 %s48, 1
        %s206 = scalar_lea.sflag [#allocation4], %s205
        %s207 = sand.u32 %s48, 1
        %s208 = smul.addr %s207, 4
        %s209 = scalar_lea.vmem [#allocation3], %s208
        %p210 = pneg %p61
        %p211 = pneg %p58
        %s212 = sand.u32 %s80, 1
        %s213 = scalar_lea.sflag [#allocation7], %s212
        %s214 = sand.u32 %s80, 1
        %s215 = smul.addr %s214, 8
        %s216 = scalar_lea.vmem [#allocation6], %s215
        %p217 = pneg %p93
        %p218 = pneg %p90
        %p219 = pneg %p119
        %p220 = pneg %p116
        %s221 = sand.u32 %s106, 1
        %s222 = scalar_lea.sflag [#allocation5], %s221
        %s223 = sand.u32 %s106, 1
        %s224 = smul.addr %s223, 8
        %s225 = scalar_lea.vmem [#allocation8], %s224
        %s226 = sadd.s32 %s26, %s27
        %p227 = scmp.lt.s32.totalorder %s226, 0
        %s228 = scalar_select %p227, %s226, 0
        %s229 = sadd.s32 %s26, %s27
        %p230 = scmp.lt.s32.totalorder %s229, 0
        %s231 = scalar_select %p230, %s229, 0
        %p232 = scmp.eq.s32.totalorder %s27, 0
        // Predicated region
        $region37: #{tpu_custom_call.1} parent=27 // pred_check
          %p233 = pneg %p232
        $region38: #{tpu_custom_call.1} parent=27 // pred_check_branch
          %235 = sbr.rel (%p233) target = $region40
        $region39: #{tpu_custom_call.1} parent=27 // pred_region
          %236 = vst [vmem:[#allocation2] sm:$0x1] 0.0
        $region40: #{tpu_custom_call.1} parent=27 // pred_fallthru
          _
        %v237 = vld [vmem:[%s191] sm:$0xf]
        %v238 = vld [vmem:[%s200] sm:$0x1f]
        %vm239 = vcmask 1043456
        %v240 = vsel %vm239, %v237, -inf
        %v241 = vrot.slane %v240, 4
        %v242 = vmax.f32 %v240, %v241
        %v243 = vrot.slane %v242, 2
        %v244 = vmax.f32 %v242, %v243
        %v245 = vrot.slane %v244, 1
        %v246 = vmax.f32 %v244, %v245
        %v247 = vsub.f32 %v246, %v238
        %v248 = vmul.f32 %v247, %v247
        %v249 = vmul.f32 %v248, 0.5
        %v250 = vlog2.pop %v237
        %v251 = vmul.f32 %v250, 0.6931472
        %v252 = vmax.f32 %v251, -100.0
        %v253 = vsub.f32 1.0, %v237
        %v254 = vlog2.pop %v253
        %v255 = vmul.f32 %v254, 0.6931472
        %v256 = vmax.f32 %v255, -100.0
        %v258 = vrot.slane %v252, 7
        %v260 = vmul.f32 %v238, %v258
        %v261 = vsub.f32 1.0, %v238
        %v263 = vrot.slane %v256, 7
        %v265 = vmul.f32 %v261, %v263
        %v266 = vadd.f32 %v260, %v265
        %v267 = vsub.f32 0.0, %v266
        %v268 = vmul.f32 %v267, 0.29684365
        %v269 = vmul.f32 %v267, 0.1345832
        %v271 = vrot.slane %v269, 1
        %v273 = vadd.f32 %v268, %v271
        %v274 = vmul.f32 %v267, 0.17174333
        %v276 = vrot.slane %v274, 2
        %v278 = vadd.f32 %v273, %v276
        %v279 = vmul.f32 %v267, 0.3968298
        %v281 = vrot.slane %v279, 3
        %v283 = vadd.f32 %v278, %v281
        %v285 = vrot.slane %v283, 1
        %v287 = vadd.f32 %v249, %v285
        %s288 = sadd.s32 %s26, %s27
        %s289 = smul.u32 %s288, 128
        %v290 = vlaneseq
        %v291 = vand.u32 %v290, 127
        %v292 = vstv %s289
        %v293 = vadd.s32 %v291, %v292
        %vm294 = vcmp.lt.s32.totalorder %v293, 8
        %v295 = vld [vmem:[#allocation2] sm:$0x1]
        %v296 = vsel %vm294, %v287, 0.0
        %v297 = vadd.f32 %v295, %v296
        %298 = vst [vmem:[#allocation2] sm:$0x1] %v297
        // Predicated region
        $region41: #{tpu_custom_call.1} parent=27 // pred_check
          %p299 = pneg %p232
        $region42: #{tpu_custom_call.1} parent=27 // pred_check_branch
          %301 = sbr.rel (%p299) target = $region44
        $region43: #{tpu_custom_call.1} parent=27 // pred_region
          %v302 = vld [vmem:[#allocation2] sm:$0x1]
          %vm303 = vcmask 1040384
          %v304 = vsel %vm303, %v302, 0.0
          %305 = vadd.xlane.f32.xlu0 %v304
          %v306 = vpop.xlane.xlu0 %305
          %v307 = vrot.slane %v306, 4
          %v308 = vadd.f32 %v306, %v307
          %v309 = vrot.slane %v308, 2
          %v310 = vadd.f32 %v308, %v309
          %v311 = vrot.slane %v310, 1
          %v312 = vadd.f32 %v310, %v311
          %s313 = vtos %v312
          %v314 = vstv %s313
          %315 = vst [vmem:[%s225] sm:$0xff] %v314
        $region44: #{tpu_custom_call.1} parent=27 // pred_fallthru
          _
        %s316 = sand.u32 %s106, 1
        %s317 = scalar_lea.sflag [#allocation5], %s316
        %s318 = sand.u32 %s106, 1
        %s319 = smul.addr %s318, 8
        %s320 = scalar_lea.vmem [#allocation8], %s319
        // Predicated region
        $region45: #{tpu_custom_call.1} parent=27 // pred_check
          %p321 = pneg %p116
        $region46: #{tpu_custom_call.1} parent=27 // pred_check_branch
          %323 = sbr.rel (%p321) target = $region48
        $region47: #{tpu_custom_call.1} parent=27 // pred_region
          %s325 = ssub.s32 128, 128
          %326 = vsyncadd %s317, %s325
          %s327 = smul.addr %s26, 128
          %s328 = scalar_lea.hbm %s2, %s327
          %s330 = sshll.u32 %s320, 4
          %s331 = int_to_ptr.vmem [resolvable:$true] %s330
          %333 = dma.vmem_to_hbm [thread:$0]  %s331, 128, %s328, %s317
        $region48: #{tpu_custom_call.1} parent=27 // pred_fallthru
          _
      $region28: #{tpu_custom_call.1} parent=5 // pred_fallthru
        _
      %p334 = scmp.le.s32.totalorder 2, %s17
      // Predicated region
      $region49: #{tpu_custom_call.1} parent=5 // pred_check
        %p335 = pneg %p334
      $region50: #{tpu_custom_call.1} parent=5 // pred_check_branch
        %337 = sbr.rel (%p335) target = $region52
      $region51: #{tpu_custom_call.1} parent=5 // pred_region
        %s338 = ssub.s32 %s17, 2
        // Predicated region
        $region53: #{tpu_custom_call.1} parent=51 // pred_check
          %p339 = pneg %p122
        $region54: #{tpu_custom_call.1} parent=51 // pred_check_branch
          %341 = sbr.rel (%p339) target = $region56
        $region55: #{tpu_custom_call.1} parent=51 // pred_region
          %s342 = sand.u32 %s107, 1
          %s343 = scalar_lea.sflag [#allocation5], %s342
          %s344 = sand.u32 %s107, 1
          %s345 = smul.addr %s344, 8
          %s346 = scalar_lea.vmem [#allocation8], %s345
          %347 = dma.done %s343, 128
        $region56: #{tpu_custom_call.1} parent=51 // pred_fallthru
          _
      $region52: #{tpu_custom_call.1} parent=5 // pred_fallthru
        _
    $region6: #{tpu_custom_call.1} parent=1 // loop_footer
      %s21 = sadd.s32 1, %s17
    $region7: #{tpu_custom_call.1} parent=1 // loop_footer_branch
      %16 = sbr.rel target = $region3
    $region8: #{tpu_custom_call.1} parent=1 // loop_exit
      _
    %348 = vsyncpa [#allocation4], 1
    %s349 = scalar_lea.sflag [#allocation4], 1
    %350 = vsyncpa %s349, 1
    %351 = vsyncpa [#allocation7], 1
    %s352 = scalar_lea.sflag [#allocation7], 1
    %353 = vsyncpa %s352, 1
    %354 = vsyncpa [#allocation5], 1
    %s355 = scalar_lea.sflag [#allocation5], 1
    %356 = vsyncpa %s355, 1

</llo_original>
